<compile_context>
chip_gen: v5e
topology: v5e:2x2
jax: 0.10.0
libtpu: 0.0.40
codegen_flags: <defaults>
</compile_context>

<pallas_src>
import functools

import jax
import jax.numpy as jnp
import numpy as np
from jax import lax
from jax.experimental import pallas as pl
from jax.experimental.pallas import tpu as pltpu


def _round_up(v, m):
    return (v + m - 1) // m * m


def _vmem_physical_bytes():
    """Physical VMEM per core; conservative v7x-safe fallback if unknown."""
    try:
        return int(pltpu.get_tpu_info().vmem_capacity_bytes)
    except Exception:
        return 64 << 20


# ----------------------------------------------------------------------------
# Path A: whole weight stack VMEM-resident, layer loop fused inside the body.
# ----------------------------------------------------------------------------
def _mlp_resident_kernel(x_ref, w_ref, b_ref, o_ref, *, n_layers, n_out_pad):
    """One grid step = one batch tile.

    x_ref : (tm, Dp)        bf16  padded input tile
    w_ref : (L, Dp, Dp)     bf16  full weight stack, resident in VMEM
    b_ref : (L, 1, Dp)      f32   full bias stack, resident in VMEM
    o_ref : (tm, n_out_pad) f32   padded output tile
    """
    # inputFC: no activation (matches the PyTorch module).
    acc = jnp.dot(x_ref[...], w_ref[0], preferred_element_type=jnp.float32)
    acc = acc + b_ref[0]
    h = acc.astype(jnp.bfloat16)

    # Hidden layers: Linear -> ReLU -> Dropout (identity in eval mode).
    def hidden_layer(l, h):
        a = jnp.dot(h, w_ref[l], preferred_element_type=jnp.float32)
        a = jnp.maximum(a + b_ref[l], 0.0)
        return a.astype(jnp.bfloat16)

    h = lax.fori_loop(1, n_layers - 1, hidden_layer, h, unroll=True)

    # outputFC: no activation; write only the lanes covering out_dim.
    acc = jnp.dot(h, w_ref[n_layers - 1], preferred_element_type=jnp.float32)
    acc = acc + b_ref[n_layers - 1]
    o_ref[...] = acc[:, :n_out_pad].astype(o_ref.dtype)


# ----------------------------------------------------------------------------
# Path B: per-layer weight streaming along an "arbitrary" layer grid axis.
# ----------------------------------------------------------------------------
def _mlp_streaming_kernel(x_ref, w_ref, b_ref, o_ref, act_ref, *,
                          n_layers, n_out_pad):
    """One grid step = (batch tile m, layer l).

    x_ref  : (tm, Dp)        bf16  padded input tile (same block for every l)
    w_ref  : (1, Dp, Dp)     bf16  weights of layer l (streamed / prefetched)
    b_ref  : (1, 1, Dp)      f32   bias of layer l
    o_ref  : (tm, n_out_pad) f32   padded output tile (written on last layer)
    act_ref: (tm, Dp)        bf16  VMEM scratch carrying activation across l
    """
    l = pl.program_id(1)

    @pl.when(l == 0)
    def _():
        act_ref[...] = x_ref[...]

    acc = jnp.dot(act_ref[...], w_ref[0], preferred_element_type=jnp.float32)
    acc = acc + b_ref[0]

    # ReLU only on hidden layers (l = 1 .. n_layers-2); Dropout is identity.
    relu_gate = jnp.logical_and(l > 0, l < n_layers - 1)
    floor = jnp.where(relu_gate, jnp.float32(0.0), jnp.float32(-jnp.inf))
    acc = jnp.maximum(acc, floor)

    # Carry to the next layer; the last layer skips the (dead) write-back.
    @pl.when(l < n_layers - 1)
    def _():
        act_ref[...] = acc.astype(act_ref.dtype)

    @pl.when(l == n_layers - 1)
    def _():
        o_ref[...] = acc[:, :n_out_pad].astype(o_ref.dtype)


# ----------------------------------------------------------------------------
# Parameter init / packing.
# ----------------------------------------------------------------------------
def init_mlp_params(key, input_dim, hidden_dim, output_dim, num_layers):
    """Deterministic init mirroring nn.Linear's default U(-1/sqrt(fan_in), ...)."""

    def linear_init(k, fan_in, fan_out):
        kw, kb = jax.random.split(k)
        bound = 1.0 / np.sqrt(fan_in)
        w = jax.random.uniform(kw, (fan_in, fan_out), jnp.float32, -bound, bound)
        b = jax.random.uniform(kb, (fan_out,), jnp.float32, -bound, bound)
        return w, b

    keys = jax.random.split(key, num_layers + 2)
    return {
        "inputFC": linear_init(keys[0], input_dim, hidden_dim),
        "hidden": [
            linear_init(keys[1 + i], hidden_dim, hidden_dim)
            for i in range(num_layers)
        ],
        "outputFC": linear_init(keys[-1], hidden_dim, output_dim),
    }


def pack_params(params):
    """Stack + zero-pad all layers into (L, Dp, Dp) bf16 weights / (L, 1, Dp) f32 biases.

    Done ONCE: zero padding of input/output features is neutral for x @ W + b
    with zero-padded bias and survives ReLU.
    """
    layers = [params["inputFC"], *params["hidden"], params["outputFC"]]
    d_pad = _round_up(max(max(w.shape) for w, _ in layers), 128)
    n = len(layers)
    w_all = np.zeros((n, d_pad, d_pad), np.float32)
    b_all = np.zeros((n, 1, d_pad), np.float32)
    for i, (w, b) in enumerate(layers):
        ki, ni = w.shape
        w_all[i, :ki, :ni] = np.asarray(w)
        b_all[i, 0, :ni] = np.asarray(b)
    return jnp.asarray(w_all, jnp.bfloat16), jnp.asarray(b_all, jnp.float32)


# ----------------------------------------------------------------------------
# Wrapper.
# ----------------------------------------------------------------------------
def mlp_forward_fused(w_all, b_all, x, *, out_dim, block_m=512,
                      force_streaming=False):
    """Whole-MLP forward in one pallas_call."""
    M, K = x.shape
    n_layers, d_pad, _ = w_all.shape
    n_out_pad = _round_up(out_dim, 128)
    assert n_out_pad <= d_pad

    # bf16 packs two rows per sublane -> batch tile must be a multiple of 16.
    tm = min(block_m, _round_up(M, 16))
    # v7x has 2 TensorCores; expose >=2 batch tiles when the batch is large
    # enough to keep per-tile arithmetic intensity (>~320 rows / tile).
    if _round_up(M, 16) <= tm and M >= 2 * 320:
        tm = _round_up(-(-M // 2), 16)
    m_pad = _round_up(M, tm)
    n_tiles_m = m_pad // tm

    # Single pad + bf16 cast of the input for the whole network.
    xp = jnp.pad(x.astype(jnp.bfloat16), ((0, m_pad - M), (0, d_pad - K)))

    vmem_phys = _vmem_physical_bytes()
    vmem_cap = int(0.75 * vmem_phys)          # ~48 MiB on v7x, ~96 MiB on v5e/v6e

    w_bytes = int(w_all.size) * 2
    b_bytes = int(b_all.size) * 4
    weights_fit = (w_bytes + b_bytes) <= min(16 << 20, vmem_phys // 4)
    use_resident = weights_fit and not force_streaming

    flops = 2 * m_pad * d_pad * d_pad * n_layers

    if use_resident:
        # Weights are loaded into VMEM once for the whole call.
        bytes_accessed = (m_pad * d_pad * 2        # x (bf16 in)
                          + w_bytes + b_bytes      # weights/biases, once
                          + m_pad * n_out_pad * 4)  # output (f32)
        vmem_need = (w_bytes + b_bytes
                     + 2 * tm * d_pad * 2          # x double buffer
                     + 2 * tm * n_out_pad * 4      # output double buffer
                     + 4 * tm * d_pad * 4)         # live activations / headroom
        vmem_limit = int(min(max(2 * vmem_need, 4 << 20), vmem_cap))

        out = pl.pallas_call(
            functools.partial(_mlp_resident_kernel,
                              n_layers=n_layers, n_out_pad=n_out_pad),
            out_shape=jax.ShapeDtypeStruct((m_pad, n_out_pad), jnp.float32),
            grid=(n_tiles_m,),
            in_specs=[
                pl.BlockSpec((tm, d_pad), lambda m: (m, 0)),
                pl.BlockSpec(memory_space=pltpu.MemorySpace.VMEM),  # full weight stack
                pl.BlockSpec(memory_space=pltpu.MemorySpace.VMEM),  # full bias stack
            ],
            out_specs=pl.BlockSpec((tm, n_out_pad), lambda m: (m, 0)),
            compiler_params=pltpu.CompilerParams(
                dimension_semantics=("parallel",),
                vmem_limit_bytes=vmem_limit,
            ),
            cost_estimate=pl.CostEstimate(
                flops=flops, transcendentals=0, bytes_accessed=bytes_accessed),
        )(xp, w_all, b_all)
    else:
        # Weights are re-streamed from HBM once per batch tile.
        bytes_accessed = (m_pad * d_pad * 2
                          + n_tiles_m * (w_bytes + b_bytes)
                          + m_pad * n_out_pad * 4)
        vmem_need = (2 * (tm * d_pad * 2 + d_pad * d_pad * 2 + d_pad * 4)
                     + 2 * tm * n_out_pad * 4
                     + tm * d_pad * 2              # activation scratch
                     + 2 * tm * d_pad * 4)         # headroom
        vmem_limit = int(min(max(2 * vmem_need, 4 << 20), vmem_cap))

        out = pl.pallas_call(
            functools.partial(_mlp_streaming_kernel,
                              n_layers=n_layers, n_out_pad=n_out_pad),
            out_shape=jax.ShapeDtypeStruct((m_pad, n_out_pad), jnp.float32),
            grid=(n_tiles_m, n_layers),
            in_specs=[
                # Input tile: one DMA per batch tile, reused across all layers.
                pl.BlockSpec((tm, d_pad), lambda m, l: (m, 0)),
                # Layer l weights/bias: streamed (prefetched) along the layer axis.
                pl.BlockSpec((1, d_pad, d_pad), lambda m, l: (l, 0, 0)),
                pl.BlockSpec((1, 1, d_pad), lambda m, l: (l, 0, 0)),
            ],
            out_specs=pl.BlockSpec((tm, n_out_pad), lambda m, l: (m, 0)),
            scratch_shapes=[pltpu.VMEM((tm, d_pad), jnp.bfloat16)],
            compiler_params=pltpu.CompilerParams(
                dimension_semantics=("parallel", "arbitrary"),
                vmem_limit_bytes=vmem_limit,
            ),
            cost_estimate=pl.CostEstimate(
                flops=flops, transcendentals=0, bytes_accessed=bytes_accessed),
        )(xp, w_all, b_all)

    # Single slice at the very end removes batch/feature padding.
    return out[:M, :out_dim]


def mlp_reference(params, x):
    """Pure-JAX reference mirroring the kernel numerics (bf16 MXU, f32 accumulate)."""

    def lin(h, w, b, relu):
        y = jnp.dot(h.astype(jnp.bfloat16), w.astype(jnp.bfloat16),
                    preferred_element_type=jnp.float32) + b
        return jnp.maximum(y, 0.0) if relu else y

    w, b = params["inputFC"]
    h = lin(x, w, b, False)
    for w, b in params["hidden"]:
        h = lin(h, w, b, True)          # dropout = identity (eval)
    w, b = params["outputFC"]
    return lin(h, w, b, False)


if __name__ == "__main__":
    batch, input_dim, hidden_dim, output_dim, num_layers = 4, 16, 32, 8, 2

    key = jax.random.PRNGKey(0)
    kx, kp = jax.random.split(key)
    x = jax.random.normal(kx, (batch, input_dim), jnp.float32)
    params = init_mlp_params(kp, input_dim, hidden_dim, output_dim, num_layers)

    w_all, b_all = pack_params(params)
    ref = mlp_reference(params, x)

    # Path A (auto-selected here): weights VMEM-resident, layer loop fused in-body.
    fwd = jax.jit(functools.partial(mlp_forward_fused, out_dim=output_dim))
    out = jax.block_until_ready(fwd(w_all, b_all, x))
    assert out.shape == (batch, output_dim), out.shape
    np.testing.assert_allclose(np.asarray(out), np.asarray(ref), rtol=1e-2, atol=1e-2)

    # Path B (layer-streaming grid), exercised explicitly so it stays healthy.
    fwd_stream = jax.jit(functools.partial(
        mlp_forward_fused, out_dim=output_dim, force_streaming=True))
    out_s = jax.block_until_ready(fwd_stream(w_all, b_all, x))
    np.testing.assert_allclose(np.asarray(out_s), np.asarray(ref), rtol=1e-2, atol=1e-2)

    print("KERNEL_OK")
</pallas_src>

<mosaic_0001>
module attributes {stable_mosaic.version = 11 : i64} {
  func.func @_mlp_resident_kernel(%arg0: i32, %arg1: memref<16x128xbf16, #tpu.memory_space<vmem>>, %arg2: memref<4x128x128xbf16, #tpu.memory_space<vmem>>, %arg3: memref<4x1x128xf32, #tpu.memory_space<vmem>>, %arg4: memref<16x128xf32, #tpu.memory_space<vmem>>) attributes {dimension_semantics = [#tpu.dimension_semantics<parallel>], iteration_bounds = array<i64: 1>, scalar_prefetch = 0 : i64, scratch_operands = 0 : i64, tpu.core_type = #tpu.core_type<tc>, window_params = [{transform_indices = @transform_0, window_bounds = array<i64: 16, 128>}, {pipeline_mode = #tpu.pipeline_mode<synchronous>, transform_indices = @transform_1, window_bounds = array<i64: 4, 128, 128>}, {pipeline_mode = #tpu.pipeline_mode<synchronous>, transform_indices = @transform_2, window_bounds = array<i64: 4, 1, 128>}, {transform_indices = @transform_3, window_bounds = array<i64: 16, 128>}]} {
    %c0 = arith.constant 0 : index
    %c0_0 = arith.constant 0 : index
    %0 = vector.load %arg1[%c0, %c0_0] : memref<16x128xbf16, #tpu.memory_space<vmem>>, vector<16x128xbf16>
    %c0_1 = arith.constant 0 : index
    %c0_2 = arith.constant 0 : index
    %c0_3 = arith.constant 0 : index
    %1 = vector.load %arg2[%c0_1, %c0_2, %c0_3] : memref<4x128x128xbf16, #tpu.memory_space<vmem>>, vector<1x128x128xbf16>
    %2 = vector.shape_cast %1 : vector<1x128x128xbf16> to vector<128x128xbf16>
    %cst = arith.constant dense<0.000000e+00> : vector<16x128xf32>
    %3 = tpu.matmul %0, %2, %cst {dimension_numbers = #tpu.dot_dimension_numbers<[1], [0], [0], [1], [0, 0, 1, 1], [], []>} : vector<16x128xbf16>, vector<128x128xbf16>, vector<16x128xf32> -> vector<16x128xf32>
    %c0_4 = arith.constant 0 : index
    %c0_5 = arith.constant 0 : index
    %c0_6 = arith.constant 0 : index
    %4 = vector.load %arg3[%c0_4, %c0_5, %c0_6] : memref<4x1x128xf32, #tpu.memory_space<vmem>>, vector<1x1x128xf32>
    %5 = vector.shape_cast %4 : vector<1x1x128xf32> to vector<1x128xf32>
    %6 = vector.broadcast %5 : vector<1x128xf32> to vector<16x128xf32>
    %7 = arith.addf %3, %6 : vector<16x128xf32>
    %8 = arith.truncf %7 : vector<16x128xf32> to vector<16x128xbf16>
    %c1_i32 = arith.constant 1 : i32
    %9 = arith.index_cast %c1_i32 : i32 to index
    %c0_7 = arith.constant 0 : index
    %c0_8 = arith.constant 0 : index
    %10 = vector.load %arg2[%9, %c0_7, %c0_8] : memref<4x128x128xbf16, #tpu.memory_space<vmem>>, vector<1x128x128xbf16>
    %11 = vector.shape_cast %10 : vector<1x128x128xbf16> to vector<128x128xbf16>
    %cst_9 = arith.constant dense<0.000000e+00> : vector<16x128xf32>
    %12 = tpu.matmul %8, %11, %cst_9 {dimension_numbers = #tpu.dot_dimension_numbers<[1], [0], [0], [1], [0, 0, 1, 1], [], []>} : vector<16x128xbf16>, vector<128x128xbf16>, vector<16x128xf32> -> vector<16x128xf32>
    %13 = arith.index_cast %c1_i32 : i32 to index
    %c0_10 = arith.constant 0 : index
    %c0_11 = arith.constant 0 : index
    %14 = vector.load %arg3[%13, %c0_10, %c0_11] : memref<4x1x128xf32, #tpu.memory_space<vmem>>, vector<1x1x128xf32>
    %15 = vector.shape_cast %14 : vector<1x1x128xf32> to vector<1x128xf32>
    %16 = vector.broadcast %15 : vector<1x128xf32> to vector<16x128xf32>
    %17 = arith.addf %12, %16 : vector<16x128xf32>
    %cst_12 = arith.constant 0.000000e+00 : f32
    %18 = vector.broadcast %cst_12 : f32 to vector<16x128xf32>
    %19 = arith.maximumf %17, %18 : vector<16x128xf32>
    %20 = arith.truncf %19 : vector<16x128xf32> to vector<16x128xbf16>
    %c2_i32 = arith.constant 2 : i32
    %21 = arith.index_cast %c2_i32 : i32 to index
    %c0_13 = arith.constant 0 : index
    %c0_14 = arith.constant 0 : index
    %22 = vector.load %arg2[%21, %c0_13, %c0_14] : memref<4x128x128xbf16, #tpu.memory_space<vmem>>, vector<1x128x128xbf16>
    %23 = vector.shape_cast %22 : vector<1x128x128xbf16> to vector<128x128xbf16>
    %cst_15 = arith.constant dense<0.000000e+00> : vector<16x128xf32>
    %24 = tpu.matmul %20, %23, %cst_15 {dimension_numbers = #tpu.dot_dimension_numbers<[1], [0], [0], [1], [0, 0, 1, 1], [], []>} : vector<16x128xbf16>, vector<128x128xbf16>, vector<16x128xf32> -> vector<16x128xf32>
    %25 = arith.index_cast %c2_i32 : i32 to index
    %c0_16 = arith.constant 0 : index
    %c0_17 = arith.constant 0 : index
    %26 = vector.load %arg3[%25, %c0_16, %c0_17] : memref<4x1x128xf32, #tpu.memory_space<vmem>>, vector<1x1x128xf32>
    %27 = vector.shape_cast %26 : vector<1x1x128xf32> to vector<1x128xf32>
    %28 = vector.broadcast %27 : vector<1x128xf32> to vector<16x128xf32>
    %29 = arith.addf %24, %28 : vector<16x128xf32>
    %cst_18 = arith.constant 0.000000e+00 : f32
    %30 = vector.broadcast %cst_18 : f32 to vector<16x128xf32>
    %31 = arith.maximumf %29, %30 : vector<16x128xf32>
    %32 = arith.truncf %31 : vector<16x128xf32> to vector<16x128xbf16>
    %c2_i32_19 = arith.constant 2 : i32
    %c3 = arith.constant 3 : index
    %c0_20 = arith.constant 0 : index
    %c0_21 = arith.constant 0 : index
    %33 = vector.load %arg2[%c3, %c0_20, %c0_21] : memref<4x128x128xbf16, #tpu.memory_space<vmem>>, vector<1x128x128xbf16>
    %34 = vector.shape_cast %33 : vector<1x128x128xbf16> to vector<128x128xbf16>
    %cst_22 = arith.constant dense<0.000000e+00> : vector<16x128xf32>
    %35 = tpu.matmul %32, %34, %cst_22 {dimension_numbers = #tpu.dot_dimension_numbers<[1], [0], [0], [1], [0, 0, 1, 1], [], []>} : vector<16x128xbf16>, vector<128x128xbf16>, vector<16x128xf32> -> vector<16x128xf32>
    %c3_23 = arith.constant 3 : index
    %c0_24 = arith.constant 0 : index
    %c0_25 = arith.constant 0 : index
    %36 = vector.load %arg3[%c3_23, %c0_24, %c0_25] : memref<4x1x128xf32, #tpu.memory_space<vmem>>, vector<1x1x128xf32>
    %37 = vector.shape_cast %36 : vector<1x1x128xf32> to vector<1x128xf32>
    %38 = vector.broadcast %37 : vector<1x128xf32> to vector<16x128xf32>
    %39 = arith.addf %35, %38 : vector<16x128xf32>
    %c0_26 = arith.constant 0 : index
    %c0_27 = arith.constant 0 : index
    %40 = vector.load %arg4[%c0_26, %c0_27] : memref<16x128xf32, #tpu.memory_space<vmem>>, vector<16x128xf32>
    tpu.vector_store %arg4[%c0_26, %c0_27], %39 {strides = array<i32>} : memref<16x128xf32, #tpu.memory_space<vmem>>, vector<16x128xf32>,
    return
  }
  func.func @transform_0(%arg0: i32) -> (i32, i32) {
    %c0_i32 = arith.constant 0 : i32
    %c0_i32_0 = arith.constant 0 : i32
    return %arg0, %c0_i32 : i32, i32
  }
  func.func @transform_1(%arg0: i32) -> (i32, i32, i32) {
    %c0_i32 = arith.constant 0 : i32
    %c0_i32_0 = arith.constant 0 : i32
    %c0_i32_1 = arith.constant 0 : i32
    %c0_i32_2 = arith.constant 0 : i32
    return %c0_i32, %c0_i32_0, %c0_i32_1 : i32, i32, i32
  }
  func.func @transform_2(%arg0: i32) -> (i32, i32, i32) {
    %c0_i32 = arith.constant 0 : i32
    %c0_i32_0 = arith.constant 0 : i32
    %c0_i32_1 = arith.constant 0 : i32
    %c0_i32_2 = arith.constant 0 : i32
    return %c0_i32, %c0_i32_0, %c0_i32_1 : i32, i32, i32
  }
  func.func @transform_3(%arg0: i32) -> (i32, i32) {
    %c0_i32 = arith.constant 0 : i32
    %c0_i32_0 = arith.constant 0 : i32
    return %arg0, %c0_i32 : i32, i32
  }
}

</mosaic_0001>

<llo_original>
// kernel: mlp_forward_fused.1
$region0: #{mlp_forward_fused.1}
  #allocation0 [shape = 'u32[]', space=smem, size = 0x4, offset = 0x4, fixed_abs, tag = 'smem constant byte address 0x4 - core index']
  #allocation1 [shape = 'u32[72,128]{1,0:T(1,128)}', space=vmem, size = 0x9000, scoped, tag = 'internal scratch']
  %s0 = inlined_call_operand.vmem [shape: bf16[16,128], index: 0, kind: input, shape index: {}]
  %s1 = inlined_call_operand.hbm [shape: bf16[4,128,128], index: 1, kind: input, shape index: {}]
  %s2 = inlined_call_operand.vmem [shape: f32[4,1,128], index: 2, kind: input, shape index: {}]
  %s3 = inlined_call_operand.vmem [shape: f32[16,128], index: 3, kind: output, shape index: {}]
  %s4 = sld [smem:[#allocation0]]
  $region26: #{mlp_forward_fused.1} parent=0
    _
  %s6 = ssub.s32 1, %s4
  %s7 = scalar_select 0, %s6, %s4
  $region1: #{mlp_forward_fused.1} parent=0
    #allocation2 [shape = 'u8[131072]{0}', space=vmem, size = 0x20000, scoped, tag = 'input window, operand 1, single buffered']
    #allocation3 [shape = 's32[1]{0}', space=sflag, size = 0x4, scoped, tag = 'scoped memory for mlp_forward_fused.1']
    %8 = vsyncpa [#allocation3], 0
    // Predicated region
    $region2: #{mlp_forward_fused.1} parent=1 // pred_check
      _
    $region3: #{mlp_forward_fused.1} parent=1 // pred_check_branch
      %10 = sbr.rel (0) target = $region5
    $region4: #{mlp_forward_fused.1} parent=1 // pred_region
      _
    $region5: #{mlp_forward_fused.1} parent=1 // pred_fallthru
      _
    // Predicated region
    $region6: #{mlp_forward_fused.1} parent=1 // pred_check
      _
    $region7: #{mlp_forward_fused.1} parent=1 // pred_check_branch
      %12 = sbr.rel (0) target = $region9
    $region8: #{mlp_forward_fused.1} parent=1 // pred_region
      %14 = vsyncadd [#allocation3], 0
      %s15 = sshll.u32 %s1, 4
      %s16 = int_to_ptr.hbm [resolvable:$true] %s15
      %s17 = sshll.u32 [#allocation2], 4
      %s18 = int_to_ptr.vmem [resolvable:$true] %s17
      %23 = dma.hbm_to_vmem [thread:$0]  %s16, 4096, %s18, [#allocation3], 64, 64, 4
    $region9: #{mlp_forward_fused.1} parent=1 // pred_fallthru
      _
    // Predicated region
    $region10: #{mlp_forward_fused.1} parent=1 // pred_check
      _
    $region11: #{mlp_forward_fused.1} parent=1 // pred_check_branch
      %25 = sbr.rel (0) target = $region13
    $region12: #{mlp_forward_fused.1} parent=1 // pred_region
      _
    $region13: #{mlp_forward_fused.1} parent=1 // pred_fallthru
      _
    // Predicated region
    $region14: #{mlp_forward_fused.1} parent=1 // pred_check
      _
    $region15: #{mlp_forward_fused.1} parent=1 // pred_check_branch
      %27 = sbr.rel (0) target = $region17
    $region16: #{mlp_forward_fused.1} parent=1 // pred_region
      %29 = dma.done [#allocation3], 4096
    $region17: #{mlp_forward_fused.1} parent=1 // pred_fallthru
      _
    %v30 = vld [vmem:[%s0] sm:$0xf]
    %v31 = vld [vmem:[%s0 + $0x4] sm:$0xf]
    %v32 = vld [vmem:[#allocation2] sm:$0xf]
    %v33 = vld [vmem:[#allocation2 + $0x4] sm:$0xf]
    %v34 = vld [vmem:[#allocation2 + $0x8] sm:$0xf]
    %v35 = vld [vmem:[#allocation2 + $0xc] sm:$0xf]
    %v36 = vld [vmem:[#allocation2 + $0x10] sm:$0xf]
    %v37 = vld [vmem:[#allocation2 + $0x14] sm:$0xf]
    %v38 = vld [vmem:[#allocation2 + $0x18] sm:$0xf]
    %v39 = vld [vmem:[#allocation2 + $0x1c] sm:$0xf]
    %v40 = vld [vmem:[#allocation2 + $0x20] sm:$0xf]
    %v41 = vld [vmem:[#allocation2 + $0x24] sm:$0xf]
    %v42 = vld [vmem:[#allocation2 + $0x28] sm:$0xf]
    %v43 = vld [vmem:[#allocation2 + $0x2c] sm:$0xf]
    %v44 = vld [vmem:[#allocation2 + $0x30] sm:$0xf]
    %v45 = vld [vmem:[#allocation2 + $0x34] sm:$0xf]
    %v46 = vld [vmem:[#allocation2 + $0x38] sm:$0xf]
    %v47 = vld [vmem:[#allocation2 + $0x3c] sm:$0xf]
    %v48 = vld [vmem:[%s2] sm:$0x1]
    %v50 = vperm.slane %v48, 0
    %v54 = vunpack.c.l.b16 %v30
    %v55 = vunpack.c.l.b16 %v31
    %v56 = vpack.c.b16 %v55, %v54
    %v74 = vunpack.c.l.b16 %v32
    %v75 = vunpack.c.l.b16 %v33
    %v76 = vunpack.c.l.b16 %v34
    %v77 = vunpack.c.l.b16 %v35
    %v78 = vunpack.c.l.b16 %v36
    %v79 = vunpack.c.l.b16 %v37
    %v80 = vunpack.c.l.b16 %v38
    %v81 = vunpack.c.l.b16 %v39
    %v82 = vunpack.c.l.b16 %v40
    %v83 = vunpack.c.l.b16 %v41
    %v84 = vunpack.c.l.b16 %v42
    %v85 = vunpack.c.l.b16 %v43
    %v86 = vunpack.c.l.b16 %v44
    %v87 = vunpack.c.l.b16 %v45
    %v88 = vunpack.c.l.b16 %v46
    %v89 = vunpack.c.l.b16 %v47
    %v90 = vpack.c.b16 %v75, %v74
    %v91 = vpack.c.b16 %v77, %v76
    %v92 = vpack.c.b16 %v79, %v78
    %v93 = vpack.c.b16 %v81, %v80
    %v94 = vpack.c.b16 %v83, %v82
    %v95 = vpack.c.b16 %v85, %v84
    %v96 = vpack.c.b16 %v87, %v86
    %v97 = vpack.c.b16 %v89, %v88
    %106 = vmatpush.bf16.msra.mxu0 %v97
    %107 = vmatpush.bf16.msra.mxu0 %v96
    %108 = vmatpush.bf16.msra.mxu0 %v95
    %109 = vmatpush.bf16.msra.mxu0 %v94
    %110 = vmatpush.bf16.msra.mxu0 %v93
    %111 = vmatpush.bf16.msra.mxu0 %v92
    %112 = vmatpush.bf16.msra.mxu0 %v91
    %113 = vmatpush.bf16.msra.mxu0 %v90
    %114 = vmatmul.bf16.gmra.mxu0 %v56
    %v115 = vpop.f32.mrf.mxu0
    %v116 = vadd.f32 %v50, %v115
    %v117 = vpop.f32.mrf.mxu0
    %v118 = vadd.f32 %v50, %v117
    %119 = vdwg.mxu0
    %v120 = vpack.c.bf16 %v118, %v116
    %s121 = scalar_lea.vmem [#allocation2], 64
    %v122 = vld [vmem:[%s121] sm:$0xf]
    %v123 = vld [vmem:[%s121 + $0x4] sm:$0xf]
    %v124 = vld [vmem:[%s121 + $0x8] sm:$0xf]
    %v125 = vld [vmem:[%s121 + $0xc] sm:$0xf]
    %v126 = vld [vmem:[%s121 + $0x10] sm:$0xf]
    %v127 = vld [vmem:[%s121 + $0x14] sm:$0xf]
    %v128 = vld [vmem:[%s121 + $0x18] sm:$0xf]
    %v129 = vld [vmem:[%s121 + $0x1c] sm:$0xf]
    %v130 = vld [vmem:[%s121 + $0x20] sm:$0xf]
    %v131 = vld [vmem:[%s121 + $0x24] sm:$0xf]
    %v132 = vld [vmem:[%s121 + $0x28] sm:$0xf]
    %v133 = vld [vmem:[%s121 + $0x2c] sm:$0xf]
    %v134 = vld [vmem:[%s121 + $0x30] sm:$0xf]
    %v135 = vld [vmem:[%s121 + $0x34] sm:$0xf]
    %v136 = vld [vmem:[%s121 + $0x38] sm:$0xf]
    %v137 = vld [vmem:[%s121 + $0x3c] sm:$0xf]
    %s138 = scalar_lea.vmem %s2, 1
    %v139 = vld [vmem:[%s138] sm:$0x1]
    %v141 = vperm.slane %v139, 0
    %v159 = vunpack.c.l.b16 %v122
    %v160 = vunpack.c.l.b16 %v123
    %v161 = vunpack.c.l.b16 %v124
    %v162 = vunpack.c.l.b16 %v125
    %v163 = vunpack.c.l.b16 %v126
    %v164 = vunpack.c.l.b16 %v127
    %v165 = vunpack.c.l.b16 %v128
    %v166 = vunpack.c.l.b16 %v129
    %v167 = vunpack.c.l.b16 %v130
    %v168 = vunpack.c.l.b16 %v131
    %v169 = vunpack.c.l.b16 %v132
    %v170 = vunpack.c.l.b16 %v133
    %v171 = vunpack.c.l.b16 %v134
    %v172 = vunpack.c.l.b16 %v135
    %v173 = vunpack.c.l.b16 %v136
    %v174 = vunpack.c.l.b16 %v137
    %v175 = vpack.c.b16 %v160, %v159
    %v176 = vpack.c.b16 %v162, %v161
    %v177 = vpack.c.b16 %v164, %v163
    %v178 = vpack.c.b16 %v166, %v165
    %v179 = vpack.c.b16 %v168, %v167
    %v180 = vpack.c.b16 %v170, %v169
    %v181 = vpack.c.b16 %v172, %v171
    %v182 = vpack.c.b16 %v174, %v173
    %191 = vmatpush.bf16.msra.mxu0 %v182
    %192 = vmatpush.bf16.msra.mxu0 %v181
    %193 = vmatpush.bf16.msra.mxu0 %v180
    %194 = vmatpush.bf16.msra.mxu0 %v179
    %195 = vmatpush.bf16.msra.mxu0 %v178
    %196 = vmatpush.bf16.msra.mxu0 %v177
    %197 = vmatpush.bf16.msra.mxu0 %v176
    %198 = vmatpush.bf16.msra.mxu0 %v175
    %199 = vmatmul.bf16.gmra.mxu0 %v120
    %v200 = vpop.f32.mrf.mxu0
    %v201 = vadd.f32 %v141, %v200
    %v202 = vpop.f32.mrf.mxu0
    %v203 = vadd.f32 %v141, %v202
    %204 = vdwg.mxu0
    %v205 = vmax.f32 %v201, 0.0
    %v206 = vmax.f32 %v203, 0.0
    %v207 = vpack.c.bf16 %v206, %v205
    %s208 = scalar_lea.vmem [#allocation2], 128
    %v209 = vld [vmem:[%s208] sm:$0xf]
    %v210 = vld [vmem:[%s208 + $0x4] sm:$0xf]
    %v211 = vld [vmem:[%s208 + $0x8] sm:$0xf]
    %v212 = vld [vmem:[%s208 + $0xc] sm:$0xf]
    %v213 = vld [vmem:[%s208 + $0x10] sm:$0xf]
    %v214 = vld [vmem:[%s208 + $0x14] sm:$0xf]
    %v215 = vld [vmem:[%s208 + $0x18] sm:$0xf]
    %v216 = vld [vmem:[%s208 + $0x1c] sm:$0xf]
    %v217 = vld [vmem:[%s208 + $0x20] sm:$0xf]
    %v218 = vld [vmem:[%s208 + $0x24] sm:$0xf]
    %v219 = vld [vmem:[%s208 + $0x28] sm:$0xf]
    %v220 = vld [vmem:[%s208 + $0x2c] sm:$0xf]
    %v221 = vld [vmem:[%s208 + $0x30] sm:$0xf]
    %v222 = vld [vmem:[%s208 + $0x34] sm:$0xf]
    %v223 = vld [vmem:[%s208 + $0x38] sm:$0xf]
    %v224 = vld [vmem:[%s208 + $0x3c] sm:$0xf]
    %s225 = scalar_lea.vmem %s2, 2
    %v226 = vld [vmem:[%s225] sm:$0x1]
    %v228 = vperm.slane %v226, 0
    %v246 = vunpack.c.l.b16 %v209
    %v247 = vunpack.c.l.b16 %v210
    %v248 = vunpack.c.l.b16 %v211
    %v249 = vunpack.c.l.b16 %v212
    %v250 = vunpack.c.l.b16 %v213
    %v251 = vunpack.c.l.b16 %v214
    %v252 = vunpack.c.l.b16 %v215
    %v253 = vunpack.c.l.b16 %v216
    %v254 = vunpack.c.l.b16 %v217
    %v255 = vunpack.c.l.b16 %v218
    %v256 = vunpack.c.l.b16 %v219
    %v257 = vunpack.c.l.b16 %v220
    %v258 = vunpack.c.l.b16 %v221
    %v259 = vunpack.c.l.b16 %v222
    %v260 = vunpack.c.l.b16 %v223
    %v261 = vunpack.c.l.b16 %v224
    %v262 = vpack.c.b16 %v247, %v246
    %v263 = vpack.c.b16 %v249, %v248
    %v264 = vpack.c.b16 %v251, %v250
    %v265 = vpack.c.b16 %v253, %v252
    %v266 = vpack.c.b16 %v255, %v254
    %v267 = vpack.c.b16 %v257, %v256
    %v268 = vpack.c.b16 %v259, %v258
    %v269 = vpack.c.b16 %v261, %v260
    %278 = vmatpush.bf16.msra.mxu0 %v269
    %279 = vmatpush.bf16.msra.mxu0 %v268
    %280 = vmatpush.bf16.msra.mxu0 %v267
    %281 = vmatpush.bf16.msra.mxu0 %v266
    %282 = vmatpush.bf16.msra.mxu0 %v265
    %283 = vmatpush.bf16.msra.mxu0 %v264
    %284 = vmatpush.bf16.msra.mxu0 %v263
    %285 = vmatpush.bf16.msra.mxu0 %v262
    %286 = vmatmul.bf16.gmra.mxu0 %v207
    %v287 = vpop.f32.mrf.mxu0
    %v288 = vadd.f32 %v228, %v287
    %v289 = vpop.f32.mrf.mxu0
    %v290 = vadd.f32 %v228, %v289
    %291 = vdwg.mxu0
    %v292 = vmax.f32 %v288, 0.0
    %v293 = vmax.f32 %v290, 0.0
    %v294 = vpack.c.bf16 %v293, %v292
    %s295 = scalar_lea.vmem [#allocation2], 192
    %v296 = vld [vmem:[%s295] sm:$0xf]
    %v297 = vld [vmem:[%s295 + $0x4] sm:$0xf]
    %v298 = vld [vmem:[%s295 + $0x8] sm:$0xf]
    %v299 = vld [vmem:[%s295 + $0xc] sm:$0xf]
    %v300 = vld [vmem:[%s295 + $0x10] sm:$0xf]
    %v301 = vld [vmem:[%s295 + $0x14] sm:$0xf]
    %v302 = vld [vmem:[%s295 + $0x18] sm:$0xf]
    %v303 = vld [vmem:[%s295 + $0x1c] sm:$0xf]
    %v304 = vld [vmem:[%s295 + $0x20] sm:$0xf]
    %v305 = vld [vmem:[%s295 + $0x24] sm:$0xf]
    %v306 = vld [vmem:[%s295 + $0x28] sm:$0xf]
    %v307 = vld [vmem:[%s295 + $0x2c] sm:$0xf]
    %v308 = vld [vmem:[%s295 + $0x30] sm:$0xf]
    %v309 = vld [vmem:[%s295 + $0x34] sm:$0xf]
    %v310 = vld [vmem:[%s295 + $0x38] sm:$0xf]
    %v311 = vld [vmem:[%s295 + $0x3c] sm:$0xf]
    %s312 = scalar_lea.vmem %s2, 3
    %v313 = vld [vmem:[%s312] sm:$0x1]
    %v315 = vperm.slane %v313, 0
    %v333 = vunpack.c.l.b16 %v296
    %v334 = vunpack.c.l.b16 %v297
    %v335 = vunpack.c.l.b16 %v298
    %v336 = vunpack.c.l.b16 %v299
    %v337 = vunpack.c.l.b16 %v300
    %v338 = vunpack.c.l.b16 %v301
    %v339 = vunpack.c.l.b16 %v302
    %v340 = vunpack.c.l.b16 %v303
    %v341 = vunpack.c.l.b16 %v304
    %v342 = vunpack.c.l.b16 %v305
    %v343 = vunpack.c.l.b16 %v306
    %v344 = vunpack.c.l.b16 %v307
    %v345 = vunpack.c.l.b16 %v308
    %v346 = vunpack.c.l.b16 %v309
    %v347 = vunpack.c.l.b16 %v310
    %v348 = vunpack.c.l.b16 %v311
    %v349 = vpack.c.b16 %v334, %v333
    %v350 = vpack.c.b16 %v336, %v335
    %v351 = vpack.c.b16 %v338, %v337
    %v352 = vpack.c.b16 %v340, %v339
    %v353 = vpack.c.b16 %v342, %v341
    %v354 = vpack.c.b16 %v344, %v343
    %v355 = vpack.c.b16 %v346, %v345
    %v356 = vpack.c.b16 %v348, %v347
    %365 = vmatpush.bf16.msra.mxu0 %v356
    %366 = vmatpush.bf16.msra.mxu0 %v355
    %367 = vmatpush.bf16.msra.mxu0 %v354
    %368 = vmatpush.bf16.msra.mxu0 %v353
    %369 = vmatpush.bf16.msra.mxu0 %v352
    %370 = vmatpush.bf16.msra.mxu0 %v351
    %371 = vmatpush.bf16.msra.mxu0 %v350
    %372 = vmatpush.bf16.msra.mxu0 %v349
    %373 = vmatmul.bf16.gmra.mxu0 %v294
    %v374 = vpop.f32.mrf.mxu0
    %v375 = vadd.f32 %v315, %v374
    %v376 = vpop.f32.mrf.mxu0
    %v377 = vadd.f32 %v315, %v376
    %378 = vdwg.mxu0
    %379 = vst [vmem:[%s3] sm:$0xff] %v375
    %380 = vst [vmem:[%s3 + $0x8] sm:$0xff] %v377
    // Predicated region
    $region18: #{mlp_forward_fused.1} parent=1 // pred_check
      _
    $region19: #{mlp_forward_fused.1} parent=1 // pred_check_branch
      %382 = sbr.rel (0) target = $region21
    $region20: #{mlp_forward_fused.1} parent=1 // pred_region
      _
    $region21: #{mlp_forward_fused.1} parent=1 // pred_fallthru
      _
    // Predicated region
    $region22: #{mlp_forward_fused.1} parent=1 // pred_check
      _
    $region23: #{mlp_forward_fused.1} parent=1 // pred_check_branch
      %384 = sbr.rel (0) target = $region25
    $region24: #{mlp_forward_fused.1} parent=1 // pred_region
      _
    $region25: #{mlp_forward_fused.1} parent=1 // pred_fallthru
      _
    %385 = vsyncpa [#allocation3], 1

</llo_original>
